<compile_context>
chip_gen: v5e
topology: v5e:2x2
jax: 0.10.0
libtpu: 0.0.40
codegen_flags: <defaults>
</compile_context>

<pallas_src>
import functools

import jax
import jax.numpy as jnp
from jax.experimental import pallas as pl
from jax.experimental.pallas import tpu as pltpu


def _physics_conv_kernel(x_ref, w_ref, b_ref, o_ref, patches_ref, *,
                         tap_offsets, Cin, Wp, L, Ho, Wo, stride):
    """Fused conv + folded bias for one block of Nb images.

    x_ref:       (Nb, Cin, FL)        padded images, rows flattened (row stride Wp)
    w_ref:       (Cout, KH*KW*Cin)    conv weights, tap-major / Cin-minor
    b_ref:       (Cout, 1)            conv bias + interaction term (pre-folded, f32)
    o_ref:       (Nb, Cout, Ho*Wo)    valid (junk-free) conv output, lane dense
    patches_ref: (KH*KW*Cin, L)       VMEM scratch holding the shifted tap slices
    """
    nb = x_ref.shape[0]
    for n in range(nb):  # static unroll; Nb is kept small by the wrapper
        # Stage the KH*KW shifted views of this image -> one K = KH*KW*Cin dot.
        for t, off in enumerate(tap_offsets):
            patches_ref[t * Cin:(t + 1) * Cin, :] = x_ref[n, :, pl.ds(off, L)]
        acc = jnp.dot(w_ref[...], patches_ref[...],
                      preferred_element_type=jnp.float32)
        acc = acc + b_ref[...]                       # (Cout, L) "wide" rows
        # Drop junk columns (and apply stride) before storing, so only valid
        # bytes reach HBM and the output block stays lane dense.
        for ho in range(Ho):
            start = ho * stride * Wp
            if stride == 1:
                row = acc[:, start:start + Wo]
            else:
                # TODO(synk): strided lane slice; not exercised by the demo.
                row = acc[:, start:start + (Wo - 1) * stride + 1:stride]
            o_ref[n, :, ho * Wo:(ho + 1) * Wo] = row.astype(o_ref.dtype)


def _pick_batch_block(N, bytes_per_image, vmem_budget_bytes):
    """Largest Nb dividing N that fits the (double-buffered) VMEM budget while
    keeping >= 2 grid steps (so v7x megacore can shard the batch axis)."""
    best = 1
    for nb in range(1, N + 1):
        if N % nb:
            continue
        if N >= 2 and N // nb < 2:
            continue
        if 2 * nb * bytes_per_image > vmem_budget_bytes:
            continue
        best = nb
    return best


def physics_layer_forward(x_nchw, conv_w, conv_b, neighbor_forces,
                          stride=1, padding=0, interaction_strength=0.5,
                          compute_dtype=None):
    N, Cin, H, W = x_nchw.shape
    Cout, Cin_w, KH, KW = conv_w.shape
    assert Cin == Cin_w

    Hp, Wp = H + 2 * padding, W + 2 * padding
    Ho = (Hp - KH) // stride + 1
    Wo = (Wp - KW) // stride + 1
    H1 = Hp - KH + 1          # stride-1 output rows
    L = H1 * Wp               # "wide" flattened row length (Wp-KW+1 valid cols/row)
    FL = (Hp + 1) * Wp        # padded flat image length (one extra zero row)
    # "wide" trick bound: the last tap's flat slice must stay inside the buffer.
    assert (KH - 1) * Wp + (KW - 1) + L <= FL, "wide-conv slice out of bounds"

    # Single pad pass: conv spatial padding + one extra zero row at the bottom.
    xp = jnp.pad(x_nchw,
                 ((0, 0), (0, 0), (padding, padding + 1), (padding, padding)))
    xf = xp.reshape(N, Cin, FL)                                   # free reshape

    # Weights: (Cout, Cin, KH, KW) -> one (Cout, KH*KW*Cin) tile, tap-major.
    w2 = jnp.transpose(conv_w, (0, 2, 3, 1)).reshape(Cout, KH * KW * Cin)

    # Fold conv bias + circular-neighbor force term into one per-channel vector:
    # torch.cat([f[-1:], f[:-1]]) + torch.cat([f[1:], f[:1]]) == roll(+1)+roll(-1)
    forces = jnp.roll(neighbor_forces, 1) + jnp.roll(neighbor_forces, -1)
    b_eff = (conv_b + interaction_strength * forces).astype(jnp.float32)
    b_eff = b_eff.reshape(Cout, 1)

    if compute_dtype is not None:          # optional bf16 path (review #5)
        xf = xf.astype(compute_dtype)
        w2 = w2.astype(compute_dtype)
    in_dtype = xf.dtype

    # Batch blocking: amortize ~0.35us/step overhead and enlarge DMAs.
    bytes_per_image = (Cin * FL * in_dtype.itemsize
                       + Cout * Ho * Wo * x_nchw.dtype.itemsize)
    nb = _pick_batch_block(N, bytes_per_image, vmem_budget_bytes=8 * 1024 * 1024)

    tap_offsets = tuple(kh * Wp + kw for kh in range(KH) for kw in range(KW))
    kernel = functools.partial(_physics_conv_kernel, tap_offsets=tap_offsets,
                               Cin=Cin, Wp=Wp, L=L, Ho=Ho, Wo=Wo, stride=stride)

    out = pl.pallas_call(
        kernel,
        out_shape=jax.ShapeDtypeStruct((N, Cout, Ho * Wo), x_nchw.dtype),
        grid_spec=pltpu.PrefetchScalarGridSpec(
            num_scalar_prefetch=0,
            grid=(N // nb,),
            in_specs=[
                pl.BlockSpec((nb, Cin, FL), lambda b: (b, 0, 0)),        # images
                pl.BlockSpec((Cout, KH * KW * Cin), lambda b: (0, 0)),   # weights (resident)
                pl.BlockSpec((Cout, 1), lambda b: (0, 0)),               # folded bias
            ],
            out_specs=pl.BlockSpec((nb, Cout, Ho * Wo), lambda b: (b, 0, 0)),
            scratch_shapes=[pltpu.VMEM((KH * KW * Cin, L), in_dtype)],
        ),
        compiler_params=pltpu.CompilerParams(
            dimension_semantics=("parallel",),
            vmem_limit_bytes=32 * 1024 * 1024),
    )(xf, w2, b_eff)

    # Free row-major reshape only (bitcast) -- no strided slice pass over HBM.
    return out.reshape(N, Cout, Ho, Wo)                           # already NCHW


def _reference_forward(x_nchw, conv_w, conv_b, neighbor_forces,
                       stride, padding, interaction_strength):
    y = jax.lax.conv_general_dilated(
        x_nchw, conv_w,
        window_strides=(stride, stride),
        padding=((padding, padding), (padding, padding)),
        dimension_numbers=("NCHW", "OIHW", "NCHW"))
    y = y + conv_b.reshape(1, -1, 1, 1)
    forces = jnp.roll(neighbor_forces, 1) + jnp.roll(neighbor_forces, -1)
    return y + interaction_strength * forces.reshape(1, -1, 1, 1)


if __name__ == "__main__":
    # small, deterministic example shapes consistent with the module
    N, Cin, H, W = 2, 4, 16, 16
    Cout, Ksize = 8, 3
    strength = 0.5

    key = jax.random.PRNGKey(0)
    kx, kw, kb, kf = jax.random.split(key, 4)
    x = jax.random.normal(kx, (N, Cin, H, W), dtype=jnp.float32)
    conv_w = jax.random.normal(kw, (Cout, Cin, Ksize, Ksize), dtype=jnp.float32) * 0.1
    conv_b = jax.random.normal(kb, (Cout,), dtype=jnp.float32) * 0.1
    # module init is torch.zeros(out_channels) * 2.4; use deterministic non-zero
    # values here so the interaction path is actually exercised.
    neighbor_forces = jax.random.normal(kf, (Cout,), dtype=jnp.float32)

    # exercise both the padded and the unpadded path (stride=1 each)
    for stride, padding in [(1, 1), (1, 0)]:
        fwd = jax.jit(functools.partial(
            physics_layer_forward, stride=stride, padding=padding,
            interaction_strength=strength))
        y = jax.block_until_ready(fwd(x, conv_w, conv_b, neighbor_forces))
        y_ref = _reference_forward(x, conv_w, conv_b, neighbor_forces,
                                   stride, padding, strength)
        assert y.shape == y_ref.shape
        assert jnp.allclose(y, y_ref, atol=1e-4, rtol=1e-4)
    print("KERNEL_OK")
</pallas_src>

<mosaic_0001>
module attributes {stable_mosaic.version = 11 : i64} {
  func.func @_physics_conv_kernel(%arg0: i32, %arg1: memref<1x4x342xf32, #tpu.memory_space<vmem>>, %arg2: memref<8x36xf32, #tpu.memory_space<vmem>>, %arg3: memref<8x1xf32, #tpu.memory_space<vmem>>, %arg4: memref<1x8x256xf32, #tpu.memory_space<vmem>>, %arg5: memref<36x288xf32, #tpu.memory_space<vmem>>) attributes {dimension_semantics = [#tpu.dimension_semantics<parallel>], iteration_bounds = array<i64: 2>, scalar_prefetch = 0 : i64, scratch_operands = 1 : i64, tpu.core_type = #tpu.core_type<tc>, window_params = [{transform_indices = @transform_0, window_bounds = array<i64: 1, 4, 342>}, {pipeline_mode = #tpu.pipeline_mode<synchronous>, transform_indices = @transform_1, window_bounds = array<i64: 8, 36>}, {pipeline_mode = #tpu.pipeline_mode<synchronous>, transform_indices = @transform_2, window_bounds = array<i64: 8, 1>}, {transform_indices = @transform_3, window_bounds = array<i64: 1, 8, 256>}]} {
    %c0 = arith.constant 0 : index
    %c0_0 = arith.constant 0 : index
    %c0_1 = arith.constant 0 : index
    %0 = vector.load %arg1[%c0, %c0_0, %c0_1] : memref<1x4x342xf32, #tpu.memory_space<vmem>>, vector<1x4x288xf32>
    %1 = vector.shape_cast %0 : vector<1x4x288xf32> to vector<4x288xf32>
    %c0_2 = arith.constant 0 : index
    %c0_3 = arith.constant 0 : index
    %2 = vector.load %arg5[%c0_2, %c0_3] : memref<36x288xf32, #tpu.memory_space<vmem>>, vector<4x288xf32>
    tpu.vector_store %arg5[%c0_2, %c0_3], %1 {strides = array<i32>} : memref<36x288xf32, #tpu.memory_space<vmem>>, vector<4x288xf32>,
    %c0_4 = arith.constant 0 : index
    %c0_5 = arith.constant 0 : index
    %c1 = arith.constant 1 : index
    %3 = vector.load %arg1[%c0_4, %c0_5, %c1] : memref<1x4x342xf32, #tpu.memory_space<vmem>>, vector<1x4x288xf32>
    %4 = vector.shape_cast %3 : vector<1x4x288xf32> to vector<4x288xf32>
    %c4 = arith.constant 4 : index
    %c0_6 = arith.constant 0 : index
    %5 = vector.load %arg5[%c4, %c0_6] : memref<36x288xf32, #tpu.memory_space<vmem>>, vector<4x288xf32>
    tpu.vector_store %arg5[%c4, %c0_6], %4 {strides = array<i32>} : memref<36x288xf32, #tpu.memory_space<vmem>>, vector<4x288xf32>,
    %c0_7 = arith.constant 0 : index
    %c0_8 = arith.constant 0 : index
    %c2 = arith.constant 2 : index
    %6 = vector.load %arg1[%c0_7, %c0_8, %c2] : memref<1x4x342xf32, #tpu.memory_space<vmem>>, vector<1x4x288xf32>
    %7 = vector.shape_cast %6 : vector<1x4x288xf32> to vector<4x288xf32>
    %c8 = arith.constant 8 : index
    %c0_9 = arith.constant 0 : index
    %8 = vector.load %arg5[%c8, %c0_9] : memref<36x288xf32, #tpu.memory_space<vmem>>, vector<4x288xf32>
    tpu.vector_store %arg5[%c8, %c0_9], %7 {strides = array<i32>} : memref<36x288xf32, #tpu.memory_space<vmem>>, vector<4x288xf32>,
    %c0_10 = arith.constant 0 : index
    %c0_11 = arith.constant 0 : index
    %c18 = arith.constant 18 : index
    %9 = vector.load %arg1[%c0_10, %c0_11, %c18] : memref<1x4x342xf32, #tpu.memory_space<vmem>>, vector<1x4x288xf32>
    %10 = vector.shape_cast %9 : vector<1x4x288xf32> to vector<4x288xf32>
    %c12 = arith.constant 12 : index
    %c0_12 = arith.constant 0 : index
    %11 = vector.load %arg5[%c12, %c0_12] : memref<36x288xf32, #tpu.memory_space<vmem>>, vector<4x288xf32>
    tpu.vector_store %arg5[%c12, %c0_12], %10 {strides = array<i32>} : memref<36x288xf32, #tpu.memory_space<vmem>>, vector<4x288xf32>,
    %c0_13 = arith.constant 0 : index
    %c0_14 = arith.constant 0 : index
    %c19 = arith.constant 19 : index
    %12 = vector.load %arg1[%c0_13, %c0_14, %c19] : memref<1x4x342xf32, #tpu.memory_space<vmem>>, vector<1x4x288xf32>
    %13 = vector.shape_cast %12 : vector<1x4x288xf32> to vector<4x288xf32>
    %c16 = arith.constant 16 : index
    %c0_15 = arith.constant 0 : index
    %14 = vector.load %arg5[%c16, %c0_15] : memref<36x288xf32, #tpu.memory_space<vmem>>, vector<4x288xf32>
    tpu.vector_store %arg5[%c16, %c0_15], %13 {strides = array<i32>} : memref<36x288xf32, #tpu.memory_space<vmem>>, vector<4x288xf32>,
    %c0_16 = arith.constant 0 : index
    %c0_17 = arith.constant 0 : index
    %c20 = arith.constant 20 : index
    %15 = vector.load %arg1[%c0_16, %c0_17, %c20] : memref<1x4x342xf32, #tpu.memory_space<vmem>>, vector<1x4x288xf32>
    %16 = vector.shape_cast %15 : vector<1x4x288xf32> to vector<4x288xf32>
    %c20_18 = arith.constant 20 : index
    %c0_19 = arith.constant 0 : index
    %17 = vector.load %arg5[%c20_18, %c0_19] : memref<36x288xf32, #tpu.memory_space<vmem>>, vector<4x288xf32>
    tpu.vector_store %arg5[%c20_18, %c0_19], %16 {strides = array<i32>} : memref<36x288xf32, #tpu.memory_space<vmem>>, vector<4x288xf32>,
    %c0_20 = arith.constant 0 : index
    %c0_21 = arith.constant 0 : index
    %c36 = arith.constant 36 : index
    %18 = vector.load %arg1[%c0_20, %c0_21, %c36] : memref<1x4x342xf32, #tpu.memory_space<vmem>>, vector<1x4x288xf32>
    %19 = vector.shape_cast %18 : vector<1x4x288xf32> to vector<4x288xf32>
    %c24 = arith.constant 24 : index
    %c0_22 = arith.constant 0 : index
    %20 = vector.load %arg5[%c24, %c0_22] : memref<36x288xf32, #tpu.memory_space<vmem>>, vector<4x288xf32>
    tpu.vector_store %arg5[%c24, %c0_22], %19 {strides = array<i32>} : memref<36x288xf32, #tpu.memory_space<vmem>>, vector<4x288xf32>,
    %c0_23 = arith.constant 0 : index
    %c0_24 = arith.constant 0 : index
    %c37 = arith.constant 37 : index
    %21 = vector.load %arg1[%c0_23, %c0_24, %c37] : memref<1x4x342xf32, #tpu.memory_space<vmem>>, vector<1x4x288xf32>
    %22 = vector.shape_cast %21 : vector<1x4x288xf32> to vector<4x288xf32>
    %c28 = arith.constant 28 : index
    %c0_25 = arith.constant 0 : index
    %23 = vector.load %arg5[%c28, %c0_25] : memref<36x288xf32, #tpu.memory_space<vmem>>, vector<4x288xf32>
    tpu.vector_store %arg5[%c28, %c0_25], %22 {strides = array<i32>} : memref<36x288xf32, #tpu.memory_space<vmem>>, vector<4x288xf32>,
    %c0_26 = arith.constant 0 : index
    %c0_27 = arith.constant 0 : index
    %c38 = arith.constant 38 : index
    %24 = vector.load %arg1[%c0_26, %c0_27, %c38] : memref<1x4x342xf32, #tpu.memory_space<vmem>>, vector<1x4x288xf32>
    %25 = vector.shape_cast %24 : vector<1x4x288xf32> to vector<4x288xf32>
    %c32 = arith.constant 32 : index
    %c0_28 = arith.constant 0 : index
    %26 = vector.load %arg5[%c32, %c0_28] : memref<36x288xf32, #tpu.memory_space<vmem>>, vector<4x288xf32>
    tpu.vector_store %arg5[%c32, %c0_28], %25 {strides = array<i32>} : memref<36x288xf32, #tpu.memory_space<vmem>>, vector<4x288xf32>,
    %c0_29 = arith.constant 0 : index
    %c0_30 = arith.constant 0 : index
    %27 = vector.load %arg2[%c0_29, %c0_30] : memref<8x36xf32, #tpu.memory_space<vmem>>, vector<8x36xf32>
    %c0_31 = arith.constant 0 : index
    %c0_32 = arith.constant 0 : index
    %28 = vector.load %arg5[%c0_31, %c0_32] : memref<36x288xf32, #tpu.memory_space<vmem>>, vector<36x288xf32>
    %cst = arith.constant dense<0.000000e+00> : vector<8x288xf32>
    %29 = tpu.matmul %27, %28, %cst {dimension_numbers = #tpu.dot_dimension_numbers<[1], [0], [0], [1], [0, 0, 1, 1], [], []>} : vector<8x36xf32>, vector<36x288xf32>, vector<8x288xf32> -> vector<8x288xf32>
    %c0_33 = arith.constant 0 : index
    %c0_34 = arith.constant 0 : index
    %30 = vector.load %arg3[%c0_33, %c0_34] : memref<8x1xf32, #tpu.memory_space<vmem>>, vector<8x1xf32>
    %31 = vector.broadcast %30 : vector<8x1xf32> to vector<8x288xf32>
    %32 = arith.addf %29, %31 : vector<8x288xf32>
    %33 = vector.extract_strided_slice %32 {offsets = [0, 0], sizes = [8, 16], strides = [1, 1]} : vector<8x288xf32> to vector<8x16xf32>
    %c0_35 = arith.constant 0 : index
    %c0_36 = arith.constant 0 : index
    %c0_37 = arith.constant 0 : index
    %34 = vector.load %arg4[%c0_35, %c0_36, %c0_37] : memref<1x8x256xf32, #tpu.memory_space<vmem>>, vector<1x8x16xf32>
    %35 = vector.shape_cast %34 : vector<1x8x16xf32> to vector<8x16xf32>
    %36 = vector.shape_cast %33 : vector<8x16xf32> to vector<1x8x16xf32>
    tpu.vector_store %arg4[%c0_35, %c0_36, %c0_37], %36 {strides = array<i32>} : memref<1x8x256xf32, #tpu.memory_space<vmem>>, vector<1x8x16xf32>,
    %37 = vector.extract_strided_slice %32 {offsets = [0, 18], sizes = [8, 16], strides = [1, 1]} : vector<8x288xf32> to vector<8x16xf32>
    %c0_38 = arith.constant 0 : index
    %c0_39 = arith.constant 0 : index
    %c16_40 = arith.constant 16 : index
    %38 = vector.load %arg4[%c0_38, %c0_39, %c16_40] : memref<1x8x256xf32, #tpu.memory_space<vmem>>, vector<1x8x16xf32>
    %39 = vector.shape_cast %38 : vector<1x8x16xf32> to vector<8x16xf32>
    %40 = vector.shape_cast %37 : vector<8x16xf32> to vector<1x8x16xf32>
    tpu.vector_store %arg4[%c0_38, %c0_39, %c16_40], %40 {strides = array<i32>} : memref<1x8x256xf32, #tpu.memory_space<vmem>>, vector<1x8x16xf32>,
    %41 = vector.extract_strided_slice %32 {offsets = [0, 36], sizes = [8, 16], strides = [1, 1]} : vector<8x288xf32> to vector<8x16xf32>
    %c0_41 = arith.constant 0 : index
    %c0_42 = arith.constant 0 : index
    %c32_43 = arith.constant 32 : index
    %42 = vector.load %arg4[%c0_41, %c0_42, %c32_43] : memref<1x8x256xf32, #tpu.memory_space<vmem>>, vector<1x8x16xf32>
    %43 = vector.shape_cast %42 : vector<1x8x16xf32> to vector<8x16xf32>
    %44 = vector.shape_cast %41 : vector<8x16xf32> to vector<1x8x16xf32>
    tpu.vector_store %arg4[%c0_41, %c0_42, %c32_43], %44 {strides = array<i32>} : memref<1x8x256xf32, #tpu.memory_space<vmem>>, vector<1x8x16xf32>,
    %45 = vector.extract_strided_slice %32 {offsets = [0, 54], sizes = [8, 16], strides = [1, 1]} : vector<8x288xf32> to vector<8x16xf32>
    %c0_44 = arith.constant 0 : index
    %c0_45 = arith.constant 0 : index
    %c48 = arith.constant 48 : index
    %46 = vector.load %arg4[%c0_44, %c0_45, %c48] : memref<1x8x256xf32, #tpu.memory_space<vmem>>, vector<1x8x16xf32>
    %47 = vector.shape_cast %46 : vector<1x8x16xf32> to vector<8x16xf32>
    %48 = vector.shape_cast %45 : vector<8x16xf32> to vector<1x8x16xf32>
    tpu.vector_store %arg4[%c0_44, %c0_45, %c48], %48 {strides = array<i32>} : memref<1x8x256xf32, #tpu.memory_space<vmem>>, vector<1x8x16xf32>,
    %49 = vector.extract_strided_slice %32 {offsets = [0, 72], sizes = [8, 16], strides = [1, 1]} : vector<8x288xf32> to vector<8x16xf32>
    %c0_46 = arith.constant 0 : index
    %c0_47 = arith.constant 0 : index
    %c64 = arith.constant 64 : index
    %50 = vector.load %arg4[%c0_46, %c0_47, %c64] : memref<1x8x256xf32, #tpu.memory_space<vmem>>, vector<1x8x16xf32>
    %51 = vector.shape_cast %50 : vector<1x8x16xf32> to vector<8x16xf32>
    %52 = vector.shape_cast %49 : vector<8x16xf32> to vector<1x8x16xf32>
    tpu.vector_store %arg4[%c0_46, %c0_47, %c64], %52 {strides = array<i32>} : memref<1x8x256xf32, #tpu.memory_space<vmem>>, vector<1x8x16xf32>,
    %53 = vector.extract_strided_slice %32 {offsets = [0, 90], sizes = [8, 16], strides = [1, 1]} : vector<8x288xf32> to vector<8x16xf32>
    %c0_48 = arith.constant 0 : index
    %c0_49 = arith.constant 0 : index
    %c80 = arith.constant 80 : index
    %54 = vector.load %arg4[%c0_48, %c0_49, %c80] : memref<1x8x256xf32, #tpu.memory_space<vmem>>, vector<1x8x16xf32>
    %55 = vector.shape_cast %54 : vector<1x8x16xf32> to vector<8x16xf32>
    %56 = vector.shape_cast %53 : vector<8x16xf32> to vector<1x8x16xf32>
    tpu.vector_store %arg4[%c0_48, %c0_49, %c80], %56 {strides = array<i32>} : memref<1x8x256xf32, #tpu.memory_space<vmem>>, vector<1x8x16xf32>,
    %57 = vector.extract_strided_slice %32 {offsets = [0, 108], sizes = [8, 16], strides = [1, 1]} : vector<8x288xf32> to vector<8x16xf32>
    %c0_50 = arith.constant 0 : index
    %c0_51 = arith.constant 0 : index
    %c96 = arith.constant 96 : index
    %58 = vector.load %arg4[%c0_50, %c0_51, %c96] : memref<1x8x256xf32, #tpu.memory_space<vmem>>, vector<1x8x16xf32>
    %59 = vector.shape_cast %58 : vector<1x8x16xf32> to vector<8x16xf32>
    %60 = vector.shape_cast %57 : vector<8x16xf32> to vector<1x8x16xf32>
    tpu.vector_store %arg4[%c0_50, %c0_51, %c96], %60 {strides = array<i32>} : memref<1x8x256xf32, #tpu.memory_space<vmem>>, vector<1x8x16xf32>,
    %61 = vector.extract_strided_slice %32 {offsets = [0, 126], sizes = [8, 16], strides = [1, 1]} : vector<8x288xf32> to vector<8x16xf32>
    %c0_52 = arith.constant 0 : index
    %c0_53 = arith.constant 0 : index
    %c112 = arith.constant 112 : index
    %62 = vector.load %arg4[%c0_52, %c0_53, %c112] : memref<1x8x256xf32, #tpu.memory_space<vmem>>, vector<1x8x16xf32>
    %63 = vector.shape_cast %62 : vector<1x8x16xf32> to vector<8x16xf32>
    %64 = vector.shape_cast %61 : vector<8x16xf32> to vector<1x8x16xf32>
    tpu.vector_store %arg4[%c0_52, %c0_53, %c112], %64 {strides = array<i32>} : memref<1x8x256xf32, #tpu.memory_space<vmem>>, vector<1x8x16xf32>,
    %65 = vector.extract_strided_slice %32 {offsets = [0, 144], sizes = [8, 16], strides = [1, 1]} : vector<8x288xf32> to vector<8x16xf32>
    %c0_54 = arith.constant 0 : index
    %c0_55 = arith.constant 0 : index
    %c128 = arith.constant 128 : index
    %66 = vector.load %arg4[%c0_54, %c0_55, %c128] : memref<1x8x256xf32, #tpu.memory_space<vmem>>, vector<1x8x16xf32>
    %67 = vector.shape_cast %66 : vector<1x8x16xf32> to vector<8x16xf32>
    %68 = vector.shape_cast %65 : vector<8x16xf32> to vector<1x8x16xf32>
    tpu.vector_store %arg4[%c0_54, %c0_55, %c128], %68 {strides = array<i32>} : memref<1x8x256xf32, #tpu.memory_space<vmem>>, vector<1x8x16xf32>,
    %69 = vector.extract_strided_slice %32 {offsets = [0, 162], sizes = [8, 16], strides = [1, 1]} : vector<8x288xf32> to vector<8x16xf32>
    %c0_56 = arith.constant 0 : index
    %c0_57 = arith.constant 0 : index
    %c144 = arith.constant 144 : index
    %70 = vector.load %arg4[%c0_56, %c0_57, %c144] : memref<1x8x256xf32, #tpu.memory_space<vmem>>, vector<1x8x16xf32>
    %71 = vector.shape_cast %70 : vector<1x8x16xf32> to vector<8x16xf32>
    %72 = vector.shape_cast %69 : vector<8x16xf32> to vector<1x8x16xf32>
    tpu.vector_store %arg4[%c0_56, %c0_57, %c144], %72 {strides = array<i32>} : memref<1x8x256xf32, #tpu.memory_space<vmem>>, vector<1x8x16xf32>,
    %73 = vector.extract_strided_slice %32 {offsets = [0, 180], sizes = [8, 16], strides = [1, 1]} : vector<8x288xf32> to vector<8x16xf32>
    %c0_58 = arith.constant 0 : index
    %c0_59 = arith.constant 0 : index
    %c160 = arith.constant 160 : index
    %74 = vector.load %arg4[%c0_58, %c0_59, %c160] : memref<1x8x256xf32, #tpu.memory_space<vmem>>, vector<1x8x16xf32>
    %75 = vector.shape_cast %74 : vector<1x8x16xf32> to vector<8x16xf32>
    %76 = vector.shape_cast %73 : vector<8x16xf32> to vector<1x8x16xf32>
    tpu.vector_store %arg4[%c0_58, %c0_59, %c160], %76 {strides = array<i32>} : memref<1x8x256xf32, #tpu.memory_space<vmem>>, vector<1x8x16xf32>,
    %77 = vector.extract_strided_slice %32 {offsets = [0, 198], sizes = [8, 16], strides = [1, 1]} : vector<8x288xf32> to vector<8x16xf32>
    %c0_60 = arith.constant 0 : index
    %c0_61 = arith.constant 0 : index
    %c176 = arith.constant 176 : index
    %78 = vector.load %arg4[%c0_60, %c0_61, %c176] : memref<1x8x256xf32, #tpu.memory_space<vmem>>, vector<1x8x16xf32>
    %79 = vector.shape_cast %78 : vector<1x8x16xf32> to vector<8x16xf32>
    %80 = vector.shape_cast %77 : vector<8x16xf32> to vector<1x8x16xf32>
    tpu.vector_store %arg4[%c0_60, %c0_61, %c176], %80 {strides = array<i32>} : memref<1x8x256xf32, #tpu.memory_space<vmem>>, vector<1x8x16xf32>,
    %81 = vector.extract_strided_slice %32 {offsets = [0, 216], sizes = [8, 16], strides = [1, 1]} : vector<8x288xf32> to vector<8x16xf32>
    %c0_62 = arith.constant 0 : index
    %c0_63 = arith.constant 0 : index
    %c192 = arith.constant 192 : index
    %82 = vector.load %arg4[%c0_62, %c0_63, %c192] : memref<1x8x256xf32, #tpu.memory_space<vmem>>, vector<1x8x16xf32>
    %83 = vector.shape_cast %82 : vector<1x8x16xf32> to vector<8x16xf32>
    %84 = vector.shape_cast %81 : vector<8x16xf32> to vector<1x8x16xf32>
    tpu.vector_store %arg4[%c0_62, %c0_63, %c192], %84 {strides = array<i32>} : memref<1x8x256xf32, #tpu.memory_space<vmem>>, vector<1x8x16xf32>,
    %85 = vector.extract_strided_slice %32 {offsets = [0, 234], sizes = [8, 16], strides = [1, 1]} : vector<8x288xf32> to vector<8x16xf32>
    %c0_64 = arith.constant 0 : index
    %c0_65 = arith.constant 0 : index
    %c208 = arith.constant 208 : index
    %86 = vector.load %arg4[%c0_64, %c0_65, %c208] : memref<1x8x256xf32, #tpu.memory_space<vmem>>, vector<1x8x16xf32>
    %87 = vector.shape_cast %86 : vector<1x8x16xf32> to vector<8x16xf32>
    %88 = vector.shape_cast %85 : vector<8x16xf32> to vector<1x8x16xf32>
    tpu.vector_store %arg4[%c0_64, %c0_65, %c208], %88 {strides = array<i32>} : memref<1x8x256xf32, #tpu.memory_space<vmem>>, vector<1x8x16xf32>,
    %89 = vector.extract_strided_slice %32 {offsets = [0, 252], sizes = [8, 16], strides = [1, 1]} : vector<8x288xf32> to vector<8x16xf32>
    %c0_66 = arith.constant 0 : index
    %c0_67 = arith.constant 0 : index
    %c224 = arith.constant 224 : index
    %90 = vector.load %arg4[%c0_66, %c0_67, %c224] : memref<1x8x256xf32, #tpu.memory_space<vmem>>, vector<1x8x16xf32>
    %91 = vector.shape_cast %90 : vector<1x8x16xf32> to vector<8x16xf32>
    %92 = vector.shape_cast %89 : vector<8x16xf32> to vector<1x8x16xf32>
    tpu.vector_store %arg4[%c0_66, %c0_67, %c224], %92 {strides = array<i32>} : memref<1x8x256xf32, #tpu.memory_space<vmem>>, vector<1x8x16xf32>,
    %93 = vector.extract_strided_slice %32 {offsets = [0, 270], sizes = [8, 16], strides = [1, 1]} : vector<8x288xf32> to vector<8x16xf32>
    %c0_68 = arith.constant 0 : index
    %c0_69 = arith.constant 0 : index
    %c240 = arith.constant 240 : index
    %94 = vector.load %arg4[%c0_68, %c0_69, %c240] : memref<1x8x256xf32, #tpu.memory_space<vmem>>, vector<1x8x16xf32>
    %95 = vector.shape_cast %94 : vector<1x8x16xf32> to vector<8x16xf32>
    %96 = vector.shape_cast %93 : vector<8x16xf32> to vector<1x8x16xf32>
    tpu.vector_store %arg4[%c0_68, %c0_69, %c240], %96 {strides = array<i32>} : memref<1x8x256xf32, #tpu.memory_space<vmem>>, vector<1x8x16xf32>,
    return
  }
  func.func @transform_0(%arg0: i32) -> (i32, i32, i32) {
    %c0_i32 = arith.constant 0 : i32
    %c0_i32_0 = arith.constant 0 : i32
    %c0_i32_1 = arith.constant 0 : i32
    return %arg0, %c0_i32, %c0_i32_0 : i32, i32, i32
  }
  func.func @transform_1(%arg0: i32) -> (i32, i32) {
    %c0_i32 = arith.constant 0 : i32
    %c0_i32_0 = arith.constant 0 : i32
    %c0_i32_1 = arith.constant 0 : i32
    return %c0_i32, %c0_i32_0 : i32, i32
  }
  func.func @transform_2(%arg0: i32) -> (i32, i32) {
    %c0_i32 = arith.constant 0 : i32
    %c0_i32_0 = arith.constant 0 : i32
    %c0_i32_1 = arith.constant 0 : i32
    return %c0_i32, %c0_i32_0 : i32, i32
  }
  func.func @transform_3(%arg0: i32) -> (i32, i32, i32) {
    %c0_i32 = arith.constant 0 : i32
    %c0_i32_0 = arith.constant 0 : i32
    %c0_i32_1 = arith.constant 0 : i32
    return %arg0, %c0_i32, %c0_i32_0 : i32, i32, i32
  }
}

</mosaic_0001>

<llo_original>
// kernel: physics_layer_forward.1
$region0: #{physics_layer_forward.1}
  #allocation0 [shape = 'u32[]', space=smem, size = 0x4, offset = 0x4, fixed_abs, tag = 'smem constant byte address 0x4 - core index']
  #allocation1 [shape = 'u32[72,128]{1,0:T(1,128)}', space=vmem, size = 0x9000, scoped, tag = 'internal scratch']
  #allocation2 [shape = 'f32[36,288]{1,0:T(8,128)}', space=vmem, size = 0xf000, scoped, tag = 'scratch operand']
  %s0 = inlined_call_operand.vmem [shape: f32[2,4,342], index: 0, kind: input, shape index: {}]
  %s1 = inlined_call_operand.vmem [shape: f32[8,36], index: 1, kind: input, shape index: {}]
  %s2 = inlined_call_operand.vmem [shape: f32[8,1], index: 2, kind: input, shape index: {}]
  %s3 = inlined_call_operand.vmem [shape: f32[2,8,256], index: 3, kind: output, shape index: {}]
  %s4 = sld [smem:[#allocation0]]
  $region45: #{physics_layer_forward.1} parent=0
    _
  %s6 = ssub.s32 1, %s4
  %s7 = scalar_select 0, %s6, %s4
  loop: start=0, step=1, limit=4
  $region2: #{physics_layer_forward.1} parent=0 // loop_pre_header
    _
  $region3: #{physics_layer_forward.1} parent=0 // loop_header
    %s9 = sphi 0, %s13
    %p10 = scmp.ge.s32.totalorder %s9, 4
    %s19 = sphi 0, %s21
    %s22 = sphi 0, %s19
    %s23 = sphi 0, %s22
    %s39 = sphi 0, %s23
    %s43 = sphi 0, %s43
    %s45 = sphi 0, %s43
    %s46 = sphi 0, %s45
    %s60 = sphi 0, %s46
    %s64 = sphi 0, %s64
    %s66 = sphi 0, %s64
    %s67 = sphi 0, %s66
    %s81 = sphi 0, %s67
    %s87 = sphi 0, %s89
    %s90 = sphi 0, %s87
    %s91 = sphi 0, %s90
    %s107 = sphi 0, %s91
  $region4: #{physics_layer_forward.1} parent=0 // loop_header_branch
    %12 = sbr.rel (%p10) target = $region8
  $region5: #{physics_layer_forward.1} parent=0 // loop_body
    %s14 = ssub.s32 %s9, 1
    %s15 = ssub.s32 %s9, 2
    %s16 = sadd.s32 %s9, 1
    %s17 = ssub.s32 %s9, %s16
    %p18 = scmp.eq.s32.totalorder %s17, 0
    %s20 = sadd.s32 %s19, 1
    %s21 = scalar_select %p18, %s19, %s20
    %p24 = pneg %p18
    %p25 = scmp.eq.s32.totalorder %s9, 1
    %p26 = por %p24, %p25
    %p27 = scmp.ne.s32.totalorder %s19, %s22
    %p28 = scmp.eq.s32.totalorder %s9, 0
    %p29 = por %p27, %p28
    %p30 = scmp.ne.s32.totalorder %s19, %s22
    %p31 = scmp.eq.s32.totalorder %s14, 1
    %p32 = por %p30, %p31
    %p33 = scmp.ne.s32.totalorder %s22, %s23
    %p34 = scmp.eq.s32.totalorder %s14, 0
    %p35 = por %p33, %p34
    %p36 = scmp.ne.s32.totalorder %s22, %s23
    %p37 = scmp.eq.s32.totalorder %s15, 1
    %p38 = por %p36, %p37
    %p40 = scmp.ne.s32.totalorder %s23, %s39
    %p41 = scmp.eq.s32.totalorder %s15, 0
    %p42 = por %p40, %p41
    %s44 = sadd.s32 %s43, 1
    %p47 = scmp.eq.s32.totalorder %s9, 1
    %p48 = scmp.ne.s32.totalorder %s43, %s45
    %p49 = scmp.eq.s32.totalorder %s9, 0
    %p50 = por %p48, %p49
    %p51 = scmp.ne.s32.totalorder %s43, %s45
    %p52 = scmp.eq.s32.totalorder %s14, 1
    %p53 = por %p51, %p52
    %p54 = scmp.ne.s32.totalorder %s45, %s46
    %p55 = scmp.eq.s32.totalorder %s14, 0
    %p56 = por %p54, %p55
    %p57 = scmp.ne.s32.totalorder %s45, %s46
    %p58 = scmp.eq.s32.totalorder %s15, 1
    %p59 = por %p57, %p58
    %p61 = scmp.ne.s32.totalorder %s46, %s60
    %p62 = scmp.eq.s32.totalorder %s15, 0
    %p63 = por %p61, %p62
    %s65 = sadd.s32 %s64, 1
    %p68 = scmp.eq.s32.totalorder %s9, 1
    %p69 = scmp.ne.s32.totalorder %s64, %s66
    %p70 = scmp.eq.s32.totalorder %s9, 0
    %p71 = por %p69, %p70
    %p72 = scmp.ne.s32.totalorder %s64, %s66
    %p73 = scmp.eq.s32.totalorder %s14, 1
    %p74 = por %p72, %p73
    %p75 = scmp.ne.s32.totalorder %s66, %s67
    %p76 = scmp.eq.s32.totalorder %s14, 0
    %p77 = por %p75, %p76
    %p78 = scmp.ne.s32.totalorder %s66, %s67
    %p79 = scmp.eq.s32.totalorder %s15, 1
    %p80 = por %p78, %p79
    %p82 = scmp.ne.s32.totalorder %s67, %s81
    %p83 = scmp.eq.s32.totalorder %s15, 0
    %p84 = por %p82, %p83
    %s85 = ssub.s32 %s9, %s16
    %p86 = scmp.eq.s32.totalorder %s85, 0
    %s88 = sadd.s32 %s87, 1
    %s89 = scalar_select %p86, %s87, %s88
    %p92 = pneg %p86
    %p93 = scmp.eq.s32.totalorder %s9, 1
    %p94 = por %p92, %p93
    %p95 = scmp.ne.s32.totalorder %s87, %s90
    %p96 = scmp.eq.s32.totalorder %s9, 0
    %p97 = por %p95, %p96
    %p98 = scmp.ne.s32.totalorder %s87, %s90
    %p99 = scmp.eq.s32.totalorder %s14, 1
    %p100 = por %p98, %p99
    %p101 = scmp.ne.s32.totalorder %s90, %s91
    %p102 = scmp.eq.s32.totalorder %s14, 0
    %p103 = por %p101, %p102
    %p104 = scmp.ne.s32.totalorder %s90, %s91
    %p105 = scmp.eq.s32.totalorder %s15, 1
    %p106 = por %p104, %p105
    %p108 = scmp.ne.s32.totalorder %s91, %s107
    %p109 = scmp.eq.s32.totalorder %s15, 0
    %p110 = por %p108, %p109
    %p111 = scmp.le.s32.totalorder 1, %s9
    %p112 = scmp.lt.s32.totalorder %s9, 3
    %p113 = pnand %p111, %p112
    %p114 = pneg %p113
    // Predicated region
    $region9: #{physics_layer_forward.1} parent=5 // pred_check
      _
    $region10: #{physics_layer_forward.1} parent=5 // pred_check_branch
      %116 = sbr.rel (%p113) target = $region12
    $region11: #{physics_layer_forward.1} parent=5 // pred_region
      %s117 = ssub.s32 %s9, 1
      // Predicated region
      $region13: #{physics_layer_forward.1} parent=11 // pred_check
        %p118 = pneg %p56
      $region14: #{physics_layer_forward.1} parent=11 // pred_check_branch
        %120 = sbr.rel (%p118) target = $region16
      $region15: #{physics_layer_forward.1} parent=11 // pred_region
        _
      $region16: #{physics_layer_forward.1} parent=11 // pred_fallthru
        _
      // Predicated region
      $region17: #{physics_layer_forward.1} parent=11 // pred_check
        %p121 = pneg %p77
      $region18: #{physics_layer_forward.1} parent=11 // pred_check_branch
        %123 = sbr.rel (%p121) target = $region20
      $region19: #{physics_layer_forward.1} parent=11 // pred_region
        _
      $region20: #{physics_layer_forward.1} parent=11 // pred_fallthru
        _
    $region12: #{physics_layer_forward.1} parent=5 // pred_fallthru
      _
    %p124 = scmp.lt.s32.totalorder %s9, 2
    // Predicated region
    $region21: #{physics_layer_forward.1} parent=5 // pred_check
      %p125 = pneg %p124
    $region22: #{physics_layer_forward.1} parent=5 // pred_check_branch
      %127 = sbr.rel (%p125) target = $region24
    $region23: #{physics_layer_forward.1} parent=5 // pred_region
      // Predicated region
      $region25: #{physics_layer_forward.1} parent=23 // pred_check
        %p128 = pneg %p29
      $region26: #{physics_layer_forward.1} parent=23 // pred_check_branch
        %130 = sbr.rel (%p128) target = $region28
      $region27: #{physics_layer_forward.1} parent=23 // pred_region
        %p131 = scmp.lt.s32.totalorder %s9, 1
        %s132 = scalar_select %p131, %s9, 1
        %s133 = smul.addr %s132, 3
        %s134 = smul.addr %s133, 4
        %s135 = scalar_lea.vmem %s0, %s134
      $region28: #{physics_layer_forward.1} parent=23 // pred_fallthru
        _
    $region24: #{physics_layer_forward.1} parent=5 // pred_fallthru
      _
    %p136 = scmp.le.s32.totalorder 1, %s9
    %p137 = scmp.lt.s32.totalorder %s9, 3
    %p138 = pnand %p136, %p137
    %p139 = pneg %p138
    // Predicated region
    $region29: #{physics_layer_forward.1} parent=5 // pred_check
      _
    $region30: #{physics_layer_forward.1} parent=5 // pred_check_branch
      %141 = sbr.rel (%p138) target = $region32
    $region31: #{physics_layer_forward.1} parent=5 // pred_region
      %s142 = ssub.s32 %s9, 1
      %p143 = scmp.lt.s32.totalorder %s14, 1
      %s144 = scalar_select %p143, %s14, 1
      %s145 = smul.addr %s144, 3
      %s146 = smul.addr %s145, 4
      %s147 = scalar_lea.vmem %s0, %s146
      %p148 = pneg %p35
      %p149 = pneg %p32
      %p150 = pneg %p56
      %p151 = pneg %p53
      %p152 = pneg %p77
      %p153 = pneg %p74
      %p154 = pneg %p103
      %p155 = pneg %p100
      %p156 = scmp.lt.s32.totalorder %s14, 1
      %s157 = scalar_select %p156, %s14, 1
      %s158 = smul.addr %s157, 2
      %s159 = smul.addr %s158, 8
      %s160 = scalar_lea.vmem %s3, %s159
      %p161 = scmp.lt.s32.totalorder %s14, 1
      %s162 = scalar_select %p161, %s14, 1
      %s163 = smul.addr %s162, 3
      %s164 = smul.addr %s163, 4
      %s165 = scalar_lea.vmem %s0, %s164
      %p166 = scmp.lt.s32.totalorder %s14, 1
      %s167 = scalar_select %p166, %s14, 1
      %s168 = smul.addr %s167, 2
      %s169 = smul.addr %s168, 8
      %s170 = scalar_lea.vmem %s3, %s169
      %v171 = vld [vmem:[%s165] sm:$0xff]
      %v172 = vld [vmem:[%s165 + $0x8] sm:$0xf]
      %175 = vst [vmem:[#allocation1] ss:$2 sm:$0xff] %v171
      %s176 = scalar_lea.vmem [#allocation1], 16
      %177 = vst [vmem:[%s176] ss:$2 sm:$0xff] %v172
      %v178 = vld.sshfl [vmem:[#allocation1] sm:$0xff pattern:$0x75316420]
      %v179 = vld.sshfl [vmem:[#allocation1 + $0x8] sm:$0xff pattern:$0x75316420]
      %v180 = vld.sshfl [vmem:[#allocation1 + $0x10] sm:$0xff pattern:$0x75316420]
      %184 = vst [vmem:[#allocation2] sm:$0xf] %v178
      %185 = vst [vmem:[#allocation2 + $0x8] sm:$0xf] %v179
      %vm186 = vcmask 257024
      %187 = vst.msk [vmem:[#allocation2 + $0x10] sm:$0xf] %vm186, %v180
      %v188 = vld [vmem:[%s165] sm:$0xff]
      %v189 = vld [vmem:[%s165 + $0x8] sm:$0xf]
      %s192 = scalar_lea.vmem [#allocation1], 1
      %193 = vst [vmem:[%s192] ss:$2 sm:$0xff] %v188
      %s194 = scalar_lea.vmem [#allocation1], 17
      %195 = vst [vmem:[%s194] ss:$2 sm:$0xff] %v189
      %v196 = vld.sshfl [vmem:[#allocation1] sm:$0xff pattern:$0x75316420]
      %v197 = vld.sshfl [vmem:[#allocation1 + $0x8] sm:$0xff pattern:$0x75316420]
      %v198 = vld.sshfl [vmem:[#allocation1 + $0x10] sm:$0xff pattern:$0x75316420]
      %199 = vrot.lane.b32.xlu0 %v196, 127
      %v200 = vpop.permute.xlu0 %199
      %201 = vrot.lane.b32.xlu0 %v197, 127
      %v202 = vpop.permute.xlu0 %201
      %203 = vrot.lane.b32.xlu0 %v198, 127
      %v204 = vpop.permute.xlu0 %203
      %vm205 = vcmask 1039360
      %v206 = vsel %vm205, %v200, %v202
      %v207 = vsel %vm205, %v202, %v204
      %211 = vst [vmem:[#allocation2] sm:$0xf0] %v206
      %212 = vst [vmem:[#allocation2 + $0x8] sm:$0xf0] %v207
      %vm213 = vcmask 261124
      %214 = vst.msk [vmem:[#allocation2 + $0x10] sm:$0xf0] %vm213, %v204
      %v215 = vld [vmem:[%s165] sm:$0xff]
      %v216 = vld [vmem:[%s165 + $0x8] sm:$0xf]
      %219 = vst [vmem:[#allocation1] ss:$2 sm:$0xff] %v215
      %s220 = scalar_lea.vmem [#allocation1], 16
      %221 = vst [vmem:[%s220] ss:$2 sm:$0xff] %v216
      %v222 = vld.sshfl [vmem:[#allocation1] sm:$0xff pattern:$0x75316420]
      %v223 = vld.sshfl [vmem:[#allocation1 + $0x8] sm:$0xff pattern:$0x75316420]
      %v224 = vld.sshfl [vmem:[#allocation1 + $0x10] sm:$0xff pattern:$0x75316420]
      %225 = vrot.lane.b32.xlu0 %v222, 126
      %v226 = vpop.permute.xlu0 %225
      %227 = vrot.lane.b32.xlu0 %v223, 126
      %v228 = vpop.permute.xlu0 %227
      %229 = vrot.lane.b32.xlu0 %v224, 126
      %v230 = vpop.permute.xlu0 %229
      %vm231 = vcmask 1031168
      %v232 = vsel %vm231, %v226, %v228
      %v233 = vsel %vm231, %v228, %v230
      %237 = vst [vmem:[#allocation2 + $0x18] sm:$0xf] %v232
      %238 = vst [vmem:[#allocation2 + $0x20] sm:$0xf] %v233
      %239 = vst.msk [vmem:[#allocation2 + $0x28] sm:$0xf] %vm186, %v230
      %v240 = vld [vmem:[%s165] sm:$0xff]
      %v241 = vld [vmem:[%s165 + $0x8] sm:$0xf]
      %s244 = scalar_lea.vmem [#allocation1], 1
      %245 = vst [vmem:[%s244] ss:$2 sm:$0xff] %v240
      %s246 = scalar_lea.vmem [#allocation1], 17
      %247 = vst [vmem:[%s246] ss:$2 sm:$0xff] %v241
      %v248 = vld.sshfl [vmem:[#allocation1] sm:$0xff pattern:$0x75316420]
      %v249 = vld.sshfl [vmem:[#allocation1 + $0x8] sm:$0xff pattern:$0x75316420]
      %v250 = vld.sshfl [vmem:[#allocation1 + $0x10] sm:$0xff pattern:$0x75316420]
      %251 = vrot.lane.b32.xlu0 %v248, 110
      %v252 = vpop.permute.xlu0 %251
      %253 = vrot.lane.b32.xlu0 %v249, 110
      %v254 = vpop.permute.xlu0 %253
      %255 = vrot.lane.b32.xlu0 %v250, 110
      %v256 = vpop.permute.xlu0 %255
      %vm257 = vcmask 900096
      %v258 = vsel %vm257, %v252, %v254
      %v259 = vsel %vm257, %v254, %v256
      %263 = vst [vmem:[#allocation2 + $0x18] sm:$0xf0] %v258
      %264 = vst [vmem:[#allocation2 + $0x20] sm:$0xf0] %v259
      %265 = vst.msk [vmem:[#allocation2 + $0x28] sm:$0xf0] %vm213, %v256
      %v266 = vld [vmem:[%s165] sm:$0xff]
      %v267 = vld [vmem:[%s165 + $0x8] sm:$0xf]
      %270 = vst [vmem:[#allocation1] ss:$2 sm:$0xff] %v266
      %s271 = scalar_lea.vmem [#allocation1], 16
      %272 = vst [vmem:[%s271] ss:$2 sm:$0xff] %v267
      %v273 = vld.sshfl [vmem:[#allocation1] sm:$0xff pattern:$0x75316420]
      %v274 = vld.sshfl [vmem:[#allocation1 + $0x8] sm:$0xff pattern:$0x75316420]
      %v275 = vld.sshfl [vmem:[#allocation1 + $0x10] sm:$0xff pattern:$0x75316420]
      %276 = vrot.lane.b32.xlu0 %v273, 109
      %v277 = vpop.permute.xlu0 %276
      %278 = vrot.lane.b32.xlu0 %v274, 109
      %v279 = vpop.permute.xlu0 %278
      %280 = vrot.lane.b32.xlu0 %v275, 109
      %v281 = vpop.permute.xlu0 %280
      %vm282 = vcmask 891904
      %v283 = vsel %vm282, %v277, %v279
      %v284 = vsel %vm282, %v279, %v281
      %288 = vst [vmem:[#allocation2 + $0x30] sm:$0xf] %v283
      %289 = vst [vmem:[#allocation2 + $0x38] sm:$0xf] %v284
      %290 = vst.msk [vmem:[#allocation2 + $0x40] sm:$0xf] %vm186, %v281
      %v291 = vld [vmem:[%s165] sm:$0xff]
      %v292 = vld [vmem:[%s165 + $0x8] sm:$0xf]
      %s295 = scalar_lea.vmem [#allocation1], 1
      %296 = vst [vmem:[%s295] ss:$2 sm:$0xff] %v291
      %s297 = scalar_lea.vmem [#allocation1], 17
      %298 = vst [vmem:[%s297] ss:$2 sm:$0xff] %v292
      %v299 = vld.sshfl [vmem:[#allocation1] sm:$0xff pattern:$0x75316420]
      %v300 = vld.sshfl [vmem:[#allocation1 + $0x8] sm:$0xff pattern:$0x75316420]
      %v301 = vld.sshfl [vmem:[#allocation1 + $0x10] sm:$0xff pattern:$0x75316420]
      %302 = vrot.lane.b32.xlu0 %v299, 108
      %v303 = vpop.permute.xlu0 %302
      %304 = vrot.lane.b32.xlu0 %v300, 108
      %v305 = vpop.permute.xlu0 %304
      %306 = vrot.lane.b32.xlu0 %v301, 108
      %v307 = vpop.permute.xlu0 %306
      %vm308 = vcmask 883712
      %v309 = vsel %vm308, %v303, %v305
      %v310 = vsel %vm308, %v305, %v307
      %314 = vst [vmem:[#allocation2 + $0x30] sm:$0xf0] %v309
      %315 = vst [vmem:[#allocation2 + $0x38] sm:$0xf0] %v310
      %316 = vst.msk [vmem:[#allocation2 + $0x40] sm:$0xf0] %vm213, %v307
      %v317 = vld [vmem:[%s165] sm:$0xff]
      %v318 = vld [vmem:[%s165 + $0x8] sm:$0xf]
      %321 = vst [vmem:[#allocation1] ss:$2 sm:$0xff] %v317
      %s322 = scalar_lea.vmem [#allocation1], 16
      %323 = vst [vmem:[%s322] ss:$2 sm:$0xff] %v318
      %v324 = vld.sshfl [vmem:[#allocation1] sm:$0xff pattern:$0x75316420]
      %v325 = vld.sshfl [vmem:[#allocation1 + $0x8] sm:$0xff pattern:$0x75316420]
      %v326 = vld.sshfl [vmem:[#allocation1 + $0x10] sm:$0xff pattern:$0x75316420]
      %327 = vrot.lane.b32.xlu0 %v324, 92
      %v328 = vpop.permute.xlu0 %327
      %329 = vrot.lane.b32.xlu0 %v325, 92
      %v330 = vpop.permute.xlu0 %329
      %331 = vrot.lane.b32.xlu0 %v326, 92
      %v332 = vpop.permute.xlu0 %331
      %vm333 = vcmask 752640
      %v334 = vsel %vm333, %v328, %v330
      %v335 = vsel %vm333, %v330, %v332
      %339 = vst [vmem:[#allocation2 + $0x48] sm:$0xf] %v334
      %340 = vst [vmem:[#allocation2 + $0x50] sm:$0xf] %v335
      %341 = vst.msk [vmem:[#allocation2 + $0x58] sm:$0xf] %vm186, %v332
      %v342 = vld [vmem:[%s165] sm:$0xff]
      %v343 = vld [vmem:[%s165 + $0x8] sm:$0xf]
      %s346 = scalar_lea.vmem [#allocation1], 1
      %347 = vst [vmem:[%s346] ss:$2 sm:$0xff] %v342
      %s348 = scalar_lea.vmem [#allocation1], 17
      %349 = vst [vmem:[%s348] ss:$2 sm:$0xff] %v343
      %v350 = vld.sshfl [vmem:[#allocation1] sm:$0xff pattern:$0x75316420]
      %v351 = vld.sshfl [vmem:[#allocation1 + $0x8] sm:$0xff pattern:$0x75316420]
      %v352 = vld.sshfl [vmem:[#allocation1 + $0x10] sm:$0xff pattern:$0x75316420]
      %353 = vrot.lane.b32.xlu0 %v350, 91
      %v354 = vpop.permute.xlu0 %353
      %355 = vrot.lane.b32.xlu0 %v351, 91
      %v356 = vpop.permute.xlu0 %355
      %357 = vrot.lane.b32.xlu0 %v352, 91
      %v358 = vpop.permute.xlu0 %357
      %vm359 = vcmask 744448
      %v360 = vsel %vm359, %v354, %v356
      %v361 = vsel %vm359, %v356, %v358
      %365 = vst [vmem:[#allocation2 + $0x48] sm:$0xf0] %v360
      %366 = vst [vmem:[#allocation2 + $0x50] sm:$0xf0] %v361
      %367 = vst.msk [vmem:[#allocation2 + $0x58] sm:$0xf0] %vm213, %v358
      %v368 = vld [vmem:[%s165] sm:$0xff]
      %v369 = vld [vmem:[%s165 + $0x8] sm:$0xf]
      %372 = vst [vmem:[#allocation1] ss:$2 sm:$0xff] %v368
      %s373 = scalar_lea.vmem [#allocation1], 16
      %374 = vst [vmem:[%s373] ss:$2 sm:$0xff] %v369
      %v375 = vld.sshfl [vmem:[#allocation1] sm:$0xff pattern:$0x75316420]
      %v376 = vld.sshfl [vmem:[#allocation1 + $0x8] sm:$0xff pattern:$0x75316420]
      %v377 = vld.sshfl [vmem:[#allocation1 + $0x10] sm:$0xff pattern:$0x75316420]
      %378 = vrot.lane.b32.xlu0 %v375, 90
      %v379 = vpop.permute.xlu0 %378
      %380 = vrot.lane.b32.xlu0 %v376, 90
      %v381 = vpop.permute.xlu0 %380
      %382 = vrot.lane.b32.xlu0 %v377, 90
      %v383 = vpop.permute.xlu0 %382
      %vm384 = vcmask 736256
      %v385 = vsel %vm384, %v379, %v381
      %v386 = vsel %vm384, %v381, %v383
      %390 = vst [vmem:[#allocation2 + $0x60] sm:$0xf] %v385
      %391 = vst [vmem:[#allocation2 + $0x68] sm:$0xf] %v386
      %392 = vst.msk [vmem:[#allocation2 + $0x70] sm:$0xf] %vm186, %v383
      %v393 = vld [vmem:[%s1] sm:$0xff]
      %v394 = vld [vmem:[#allocation2] sm:$0xff]
      %v395 = vld [vmem:[#allocation2 + $0x8] sm:$0xff]
      %v396 = vld [vmem:[#allocation2 + $0x10] sm:$0xff]
      %v397 = vld [vmem:[#allocation2 + $0x18] sm:$0xff]
      %v398 = vld [vmem:[#allocation2 + $0x20] sm:$0xff]
      %v399 = vld [vmem:[#allocation2 + $0x28] sm:$0xff]
      %v400 = vld [vmem:[#allocation2 + $0x30] sm:$0xff]
      %v401 = vld [vmem:[#allocation2 + $0x38] sm:$0xff]
      %v402 = vld [vmem:[#allocation2 + $0x40] sm:$0xff]
      %v403 = vld [vmem:[#allocation2 + $0x48] sm:$0xff]
      %v404 = vld [vmem:[#allocation2 + $0x50] sm:$0xff]
      %v405 = vld [vmem:[#allocation2 + $0x58] sm:$0xff]
      %v406 = vld [vmem:[#allocation2 + $0x60] sm:$0xf]
      %v407 = vld [vmem:[#allocation2 + $0x68] sm:$0xf]
      %v408 = vld [vmem:[#allocation2 + $0x70] sm:$0xf]
      %v409 = vld [vmem:[%s2] sm:$0xff]
      %411 = vset.pattern.permute.xlu0 0
      %412 = vperm.xlu0 %411, %v409
      %v413 = vpop.permute.xlu0 %412
      %vm415 = vcmask 293888
      %v417 = vsel %vm415, %v393, 0
      %vm419 = vcmask 1043456
      %v421 = vsel %vm419, %v406, 0
      %v424 = vsel %vm419, %v407, 0
      %v427 = vsel %vm419, %v408, 0
      %429 = vmatpush.msra.mxu0 0.0
      %430 = vmatpush.msra.mxu0 0.0
      %431 = vmatpush.msra.mxu0 0.0
      %432 = vmatpush.msra.mxu0 0.0
      %433 = vmatpush.msra.mxu0 0.0
      %434 = vmatpush.msra.mxu0 0.0
      %435 = vmatpush.msra.mxu0 0.0
      %436 = vmatpush.msra.mxu0 0.0
      %437 = vmatpush.msra.mxu0 0.0
      %438 = vmatpush.msra.mxu0 0.0
      %439 = vmatpush.msra.mxu0 0.0
      %440 = vmatpush.msra.mxu0 %v421
      %441 = vmatpush.msra.mxu0 %v403
      %442 = vmatpush.msra.mxu0 %v400
      %443 = vmatpush.msra.mxu0 %v397
      %444 = vmatpush.msra.mxu0 %v394
      %445 = vmatmul.f32.gmra.mxu0 %v417
      %v446 = vpop.f32.mrf.mxu0
      %v447 = vadd.f32 %v413, %v446
      %448 = vdwg.mxu0
      %449 = vmatpush.msra.mxu0 0.0
      %450 = vmatpush.msra.mxu0 0.0
      %451 = vmatpush.msra.mxu0 0.0
      %452 = vmatpush.msra.mxu0 0.0
      %453 = vmatpush.msra.mxu0 0.0
      %454 = vmatpush.msra.mxu0 0.0
      %455 = vmatpush.msra.mxu0 0.0
      %456 = vmatpush.msra.mxu0 0.0
      %457 = vmatpush.msra.mxu0 0.0
      %458 = vmatpush.msra.mxu0 0.0
      %459 = vmatpush.msra.mxu0 0.0
      %460 = vmatpush.msra.mxu0 %v424
      %461 = vmatpush.msra.mxu0 %v404
      %462 = vmatpush.msra.mxu0 %v401
      %463 = vmatpush.msra.mxu0 %v398
      %464 = vmatpush.msra.mxu0 %v395
      %465 = vmatmul.f32.gmra.mxu0 %v417
      %v466 = vpop.f32.mrf.mxu0
      %v467 = vadd.f32 %v413, %v466
      %468 = vdwg.mxu0
      %469 = vmatpush.msra.mxu0 0.0
      %470 = vmatpush.msra.mxu0 0.0
      %471 = vmatpush.msra.mxu0 0.0
      %472 = vmatpush.msra.mxu0 0.0
      %473 = vmatpush.msra.mxu0 0.0
      %474 = vmatpush.msra.mxu0 0.0
      %475 = vmatpush.msra.mxu0 0.0
      %476 = vmatpush.msra.mxu0 0.0
      %477 = vmatpush.msra.mxu0 0.0
      %478 = vmatpush.msra.mxu0 0.0
      %479 = vmatpush.msra.mxu0 0.0
      %480 = vmatpush.msra.mxu0 %v427
      %481 = vmatpush.msra.mxu0 %v405
      %482 = vmatpush.msra.mxu0 %v402
      %483 = vmatpush.msra.mxu0 %v399
      %484 = vmatpush.msra.mxu0 %v396
      %485 = vmatmul.f32.gmra.mxu0 %v417
      %v486 = vpop.f32.mrf.mxu0
      %v487 = vadd.f32 %v413, %v486
      %488 = vdwg.mxu0
      %vm489 = vcmask 130048
      %490 = vst.msk [vmem:[%s170] sm:$0xff] %vm489, %v447
      %492 = vrot.lane.b32.xlu0 %v447, 126
      %v493 = vpop.permute.xlu0 %492
      %vm495 = vcmask 261248
      %496 = vst.msk [vmem:[%s170] sm:$0xff] %vm495, %v493
      %497 = vrot.lane.b32.xlu0 %v447, 124
      %v498 = vpop.permute.xlu0 %497
      %vm500 = vcmask 392448
      %501 = vst.msk [vmem:[%s170] sm:$0xff] %vm500, %v498
      %502 = vrot.lane.b32.xlu0 %v447, 122
      %v503 = vpop.permute.xlu0 %502
      %vm505 = vcmask 523648
      %506 = vst.msk [vmem:[%s170] sm:$0xff] %vm505, %v503
      %507 = vrot.lane.b32.xlu0 %v447, 120
      %v508 = vpop.permute.xlu0 %507
      %vm510 = vcmask 654848
      %511 = vst.msk [vmem:[%s170] sm:$0xff] %vm510, %v508
      %512 = vrot.lane.b32.xlu0 %v447, 118
      %v513 = vpop.permute.xlu0 %512
      %vm515 = vcmask 786048
      %516 = vst.msk [vmem:[%s170] sm:$0xff] %vm515, %v513
      %517 = vrot.lane.b32.xlu0 %v447, 116
      %v518 = vpop.permute.xlu0 %517
      %vm520 = vcmask 917248
      %521 = vst.msk [vmem:[%s170] sm:$0xff] %vm520, %v518
      %523 = vrot.lane.b32.xlu0 %v447, 114
      %v524 = vpop.permute.xlu0 %523
      %525 = vrot.lane.b32.xlu0 %v467, 114
      %v526 = vpop.permute.xlu0 %525
      %vm527 = vcmask 932864
      %v528 = vsel %vm527, %v524, %v526
      %vm530 = vcmask 1048448
      %531 = vst.msk [vmem:[%s170] sm:$0xff] %vm530, %v528
      %532 = vrot.lane.b32.xlu0 %v467, 112
      %v533 = vpop.permute.xlu0 %532
      %535 = vst.msk [vmem:[%s170 + $0x8] sm:$0xff] %vm489, %v533
      %536 = vrot.lane.b32.xlu0 %v467, 110
      %v537 = vpop.permute.xlu0 %536
      %539 = vst.msk [vmem:[%s170 + $0x8] sm:$0xff] %vm495, %v537
      %540 = vrot.lane.b32.xlu0 %v467, 108
      %v541 = vpop.permute.xlu0 %540
      %543 = vst.msk [vmem:[%s170 + $0x8] sm:$0xff] %vm500, %v541
      %544 = vrot.lane.b32.xlu0 %v467, 106
      %v545 = vpop.permute.xlu0 %544
      %547 = vst.msk [vmem:[%s170 + $0x8] sm:$0xff] %vm505, %v545
      %548 = vrot.lane.b32.xlu0 %v467, 104
      %v549 = vpop.permute.xlu0 %548
      %551 = vst.msk [vmem:[%s170 + $0x8] sm:$0xff] %vm510, %v549
      %552 = vrot.lane.b32.xlu0 %v467, 102
      %v553 = vpop.permute.xlu0 %552
      %555 = vst.msk [vmem:[%s170 + $0x8] sm:$0xff] %vm515, %v553
      %557 = vrot.lane.b32.xlu0 %v467, 100
      %v558 = vpop.permute.xlu0 %557
      %559 = vrot.lane.b32.xlu0 %v487, 100
      %v560 = vpop.permute.xlu0 %559
      %vm561 = vcmask 818176
      %v562 = vsel %vm561, %v558, %v560
      %564 = vst.msk [vmem:[%s170 + $0x8] sm:$0xff] %vm520, %v562
      %565 = vrot.lane.b32.xlu0 %v487, 98
      %v566 = vpop.permute.xlu0 %565
      %568 = vst.msk [vmem:[%s170 + $0x8] sm:$0xff] %vm530, %v566
      %p569 = scmp.lt.s32.totalorder %s14, 1
      %s570 = scalar_select %p569, %s14, 1
      %s571 = smul.addr %s570, 2
      %s572 = smul.addr %s571, 8
      %s573 = scalar_lea.vmem %s3, %s572
      // Predicated region
      $region33: #{physics_layer_forward.1} parent=31 // pred_check
        %p574 = pneg %p100
      $region34: #{physics_layer_forward.1} parent=31 // pred_check_branch
        %576 = sbr.rel (%p574) target = $region36
      $region35: #{physics_layer_forward.1} parent=31 // pred_region
        _
      $region36: #{physics_layer_forward.1} parent=31 // pred_fallthru
        _
    $region32: #{physics_layer_forward.1} parent=5 // pred_fallthru
      _
    %p577 = scmp.le.s32.totalorder 2, %s9
    // Predicated region
    $region37: #{physics_layer_forward.1} parent=5 // pred_check
      %p578 = pneg %p577
    $region38: #{physics_layer_forward.1} parent=5 // pred_check_branch
      %580 = sbr.rel (%p578) target = $region40
    $region39: #{physics_layer_forward.1} parent=5 // pred_region
      %s581 = ssub.s32 %s9, 2
      // Predicated region
      $region41: #{physics_layer_forward.1} parent=39 // pred_check
        %p582 = pneg %p106
      $region42: #{physics_layer_forward.1} parent=39 // pred_check_branch
        %584 = sbr.rel (%p582) target = $region44
      $region43: #{physics_layer_forward.1} parent=39 // pred_region
        %p585 = scmp.lt.s32.totalorder %s15, 1
        %s586 = scalar_select %p585, %s15, 1
        %s587 = smul.addr %s586, 2
        %s588 = smul.addr %s587, 8
        %s589 = scalar_lea.vmem %s3, %s588
      $region44: #{physics_layer_forward.1} parent=39 // pred_fallthru
        _
    $region40: #{physics_layer_forward.1} parent=5 // pred_fallthru
      _
  $region6: #{physics_layer_forward.1} parent=0 // loop_footer
    %s13 = sadd.s32 1, %s9
  $region7: #{physics_layer_forward.1} parent=0 // loop_footer_branch
    %8 = sbr.rel target = $region3
  $region8: #{physics_layer_forward.1} parent=0 // loop_exit
    _

</llo_original>
